<compile_context>
chip_gen: v5e
topology: v5e:2x2
jax: 0.10.0
libtpu: 0.0.40
codegen_flags: <defaults>
</compile_context>

<pallas_src>
import functools

import jax
import jax.numpy as jnp
from jax.experimental import pallas as pl
from jax.experimental.pallas import tpu as pltpu

_EPS = 1e-5
_INV_SQRT2 = 0.7071067811865476


def _gelu(x, approximate):
    if approximate:
        # tanh GELU -> EUP slot (near-free), but deviates slightly from
        # PyTorch's default exact erf GELU.  Off by default.
        return jax.nn.gelu(x, approximate=True)
    return 0.5 * x * (1.0 + jax.lax.erf(x * _INV_SQRT2))


def double_conv_kernel(x_ref, w1_ref, g1_ref, b1_ref, w2_ref, g2_ref, b2_ref,
                       out_ref, *, Bblk, H, Wcin, Wcmid, Wcout, residual,
                       matmul_dtype, approx_gelu):
    M = Bblk * H
    # lane-dense activation slab: rows = stacked image rows, lanes = W*Cin
    x = x_ref[...].reshape(M, Wcin)

    # Row-within-image index, used to zero the 1-row conv halo at the image
    # boundaries of the stacked M axis (only needed when several images are
    # stacked per grid step).
    if Bblk > 1:
        row = jax.lax.broadcasted_iota(jnp.int32, (M, 1), 0)
        h_in = row % H
    else:
        h_in = None

    def shift_rows(a, c_lanes, direction):
        """direction=+1: row r of result = a[r-1] (zero at image tops);
           direction=-1: row r of result = a[r+1] (zero at image bottoms)."""
        zero_row = jnp.zeros((1, c_lanes), jnp.float32)
        if direction == +1:
            s = jnp.concatenate([zero_row, a[:M - 1, :]], axis=0)
            if h_in is not None:
                s = jnp.where(h_in != 0, s, 0.0)
        else:
            s = jnp.concatenate([a[1:, :], zero_row], axis=0)
            if h_in is not None:
                s = jnp.where(h_in != H - 1, s, 0.0)
        return s

    def conv3x3(a, w_ref, c_lanes):
        # dy taps as 3 row-shifted matmuls (dx taps + W zero-padding are folded
        # into each banded weight).  MXU operands in `matmul_dtype` (bf16 by
        # default), accumulation in f32.  No halo staging buffer.
        a_dn = shift_rows(a, c_lanes, +1).astype(matmul_dtype)   # provides x[h-1]
        a_md = a.astype(matmul_dtype)                            # provides x[h]
        a_up = shift_rows(a, c_lanes, -1).astype(matmul_dtype)   # provides x[h+1]
        # TODO(synk): on v6e/v7x, concatenate [a_dn, a_md, a_up] along lanes and
        # use a (3*W*Cin, W*Cout) weight to fuse K and save 2 MXU drains.
        return (jnp.dot(a_dn, w_ref[0], preferred_element_type=jnp.float32)
                + jnp.dot(a_md, w_ref[1], preferred_element_type=jnp.float32)
                + jnp.dot(a_up, w_ref[2], preferred_element_type=jnp.float32))

    def groupnorm1(acc, c_lanes, g_ref, b_ref):
        # GroupNorm(num_groups=1): per-image stats over (C, H, W); two-pass
        # variance; affine folded into a single FMA (scale/shift precomputed).
        a3 = acc.reshape(Bblk, H, c_lanes)
        inv_n = 1.0 / float(H * c_lanes)
        mean = jnp.sum(jnp.sum(a3, axis=2, keepdims=True), axis=1,
                       keepdims=True) * inv_n                       # (Bblk,1,1)
        d = a3 - mean
        var = jnp.sum(jnp.sum(d * d, axis=2, keepdims=True), axis=1,
                      keepdims=True) * inv_n                        # (Bblk,1,1)
        inv_std = jax.lax.rsqrt(var + _EPS)
        scale = g_ref[...].reshape(1, 1, c_lanes) * inv_std         # (Bblk,1,C)
        shift = b_ref[...].reshape(1, 1, c_lanes) - mean * scale    # (Bblk,1,C)
        return (a3 * scale + shift).reshape(M, c_lanes)

    h1 = groupnorm1(conv3x3(x, w1_ref, Wcin), Wcmid, g1_ref, b1_ref)
    h1 = _gelu(h1, approx_gelu)
    h2 = groupnorm1(conv3x3(h1, w2_ref, Wcmid), Wcout, g2_ref, b2_ref)

    if residual:
        h2 = _gelu(x + h2, approx_gelu)     # Cin == Cout, same folded layout

    # lane-dense output store: last dim = W*Cout, not Cout
    out_ref[...] = h2.reshape(Bblk, H, Wcout)


def _banded_conv_weight(w_oihw, W, dtype):
    """(Cout, Cin, 3, 3) torch conv weight (stride 1, padding 1, no bias) ->
    (3, W*Cin, W*Cout) banded matmul weights: dx taps + W-direction zero
    padding folded into the K dimension, one matmul per dy tap.
    Only sensible while W*C <= ~128-256 (true at this module's sizes)."""
    Cout, Cin = int(w_oihw.shape[0]), int(w_oihw.shape[1])
    wk = jnp.transpose(w_oihw, (2, 3, 1, 0)).astype(jnp.float32)   # (3,3,Cin,Cout)
    mats = []
    for dy in range(3):
        m = jnp.zeros((W * Cin, W * Cout), jnp.float32)
        for dx in range(3):
            # band[jin, jout] = 1  iff  jin == jout + dx - 1  (implicit W padding)
            band = jnp.eye(W, W, k=1 - dx, dtype=jnp.float32)
            m = m + jnp.kron(band, wk[dy, dx])
        mats.append(m)
    return jnp.stack(mats, axis=0).astype(dtype)


def double_conv(x_nchw, w1, g1, b1, w2, g2, b2, *, residual=False,
                matmul_dtype=jnp.bfloat16, approx_gelu=False, block_b=None):
    """x_nchw: (B, Cin, H, W); w1: (Cmid, Cin, 3, 3); w2: (Cout, Cmid, 3, 3)."""
    B, Cin, H, W = map(int, x_nchw.shape)
    Cmid, Cout = int(w1.shape[0]), int(w2.shape[0])
    if residual:
        assert Cin == Cout, "residual path requires in_channels == out_channels"

    # channels folded into the lane axis: (B, H, W*Cin); no HBM-side pad copy.
    x = jnp.transpose(x_nchw, (0, 2, 3, 1)).astype(jnp.float32)
    x = x.reshape(B, H, W * Cin)

    # Batch blocking: M = block_b * H rows per matmul.  For large B keep the
    # resulting grid a multiple of the TensorCore count (v7x: 2).
    if block_b is None:
        block_b = max(1, min(B, 256 // H))
    Bp = -(-B // block_b) * block_b
    if Bp != B:   # pad with zero images; per-image GN keeps them isolated
        x = jnp.concatenate(
            [x, jnp.zeros((Bp - B, H, W * Cin), jnp.float32)], axis=0)
    grid_b = Bp // block_b

    # weights as bf16 (halves DMA bytes + VMEM residency, MXU-native on v6e/v7x)
    w1k = _banded_conv_weight(w1, W, matmul_dtype)   # (3, W*Cin,  W*Cmid)
    w2k = _banded_conv_weight(w2, W, matmul_dtype)   # (3, W*Cmid, W*Cout)
    g1k = jnp.tile(g1.astype(jnp.float32), W).reshape(1, W * Cmid)
    b1k = jnp.tile(b1.astype(jnp.float32), W).reshape(1, W * Cmid)
    g2k = jnp.tile(g2.astype(jnp.float32), W).reshape(1, W * Cout)
    b2k = jnp.tile(b2.astype(jnp.float32), W).reshape(1, W * Cout)

    kernel = functools.partial(
        double_conv_kernel, Bblk=block_b, H=H, Wcin=W * Cin, Wcmid=W * Cmid,
        Wcout=W * Cout, residual=residual, matmul_dtype=matmul_dtype,
        approx_gelu=approx_gelu)

    # explicit VMEM budget sized from the actual (double-buffered) buffers
    mm_bytes = jnp.dtype(matmul_dtype).itemsize
    buf_bytes = (block_b * H * (W * Cin + W * Cout) * 4
                 + 3 * (W * Cin * W * Cmid + W * Cmid * W * Cout) * mm_bytes
                 + 2 * (W * Cmid + W * Cout) * 4)
    vmem_limit = int(min(max(4 * buf_bytes + (8 << 20), 16 << 20), 64 << 20))

    out_folded = pl.pallas_call(
        kernel,
        out_shape=jax.ShapeDtypeStruct((Bp, H, W * Cout), jnp.float32),
        grid_spec=pltpu.PrefetchScalarGridSpec(
            num_scalar_prefetch=0,
            grid=(grid_b,),
            in_specs=[
                pl.BlockSpec((block_b, H, W * Cin), lambda b: (b, 0, 0)),
                # Grid-invariant weights / affines (constant index_map); on
                # v7x with large weights add pipeline_mode=pl.Buffered(1).
                pl.BlockSpec((3, W * Cin, W * Cmid), lambda b: (0, 0, 0)),
                pl.BlockSpec((1, W * Cmid), lambda b: (0, 0)),
                pl.BlockSpec((1, W * Cmid), lambda b: (0, 0)),
                pl.BlockSpec((3, W * Cmid, W * Cout), lambda b: (0, 0, 0)),
                pl.BlockSpec((1, W * Cout), lambda b: (0, 0)),
                pl.BlockSpec((1, W * Cout), lambda b: (0, 0)),
            ],
            out_specs=pl.BlockSpec((block_b, H, W * Cout), lambda b: (b, 0, 0)),
        ),
        compiler_params=pltpu.CompilerParams(
            dimension_semantics=("parallel",),       # batch-block axis
            vmem_limit_bytes=vmem_limit),
    )(x, w1k, g1k, b1k, w2k, g2k, b2k)

    out = out_folded[:B].reshape(B, H, W, Cout)
    return jnp.transpose(out, (0, 3, 1, 2))          # back to NCHW


# ---------------- pure-JAX reference (for verification) ----------------
def _ref_double_conv(x, w1, g1, b1, w2, g2, b2, residual):
    def conv(h, w):
        return jax.lax.conv_general_dilated(
            h, w, window_strides=(1, 1), padding=((1, 1), (1, 1)),
            dimension_numbers=("NCHW", "OIHW", "NCHW"))

    def gn(h, g, bta):
        mean = jnp.mean(h, axis=(1, 2, 3), keepdims=True)
        var = jnp.mean((h - mean) ** 2, axis=(1, 2, 3), keepdims=True)
        hn = (h - mean) / jnp.sqrt(var + _EPS)
        return hn * g.reshape(1, -1, 1, 1) + bta.reshape(1, -1, 1, 1)

    h = conv(x, w1)
    h = gn(h, g1, b1)
    h = _gelu(h, False)
    h = conv(h, w2)
    h = gn(h, g2, b2)
    if residual:
        h = _gelu(x + h, False)
    return h


def _make_params(key, cin, cmid, cout):
    k1, k2 = jax.random.split(key)
    w1 = jax.random.normal(k1, (cmid, cin, 3, 3), jnp.float32) * 0.2
    w2 = jax.random.normal(k2, (cout, cmid, 3, 3), jnp.float32) * 0.2
    g1 = jnp.ones((cmid,), jnp.float32)
    b1 = jnp.zeros((cmid,), jnp.float32)
    g2 = jnp.ones((cout,), jnp.float32)
    b2 = jnp.zeros((cout,), jnp.float32)
    return w1, g1, b1, w2, g2, b2


if __name__ == "__main__":
    key = jax.random.PRNGKey(0)
    kx, kp1, kp2, kx3 = jax.random.split(key, 4)

    B, Cin, H, W = 2, 4, 16, 16
    Cmid = Cout = 8
    x = jax.random.normal(kx, (B, Cin, H, W), jnp.float32)
    p1 = _make_params(kp1, Cin, Cmid, Cout)
    ref1 = _ref_double_conv(x, *p1, residual=False)

    # Case 1: residual=False, f32 MXU operands (tight check of the algorithm)
    out1 = jax.block_until_ready(
        double_conv(x, *p1, residual=False, matmul_dtype=jnp.float32))
    assert jnp.allclose(out1, ref1, atol=2e-3, rtol=2e-3), "mismatch f32 residual=False"

    # Case 2: residual=True requires in_channels == out_channels, f32 operands
    Cin2 = Cmid2 = Cout2 = 4
    x2 = jax.random.normal(kx, (B, Cin2, H, W), jnp.float32)
    p2 = _make_params(kp2, Cin2, Cmid2, Cout2)
    ref2 = _ref_double_conv(x2, *p2, residual=True)
    out2 = jax.block_until_ready(
        double_conv(x2, *p2, residual=True, matmul_dtype=jnp.float32))
    assert jnp.allclose(out2, ref2, atol=2e-3, rtol=2e-3), "mismatch f32 residual=True"

    # Case 3: default perf path (bf16 MXU operands), looser tolerance
    out3 = jax.block_until_ready(double_conv(x2, *p2, residual=True))
    assert jnp.allclose(out3, ref2, atol=6e-2, rtol=6e-2), "mismatch bf16 residual=True"

    # Case 4: block_b=1 (single image per step: unmasked halo path, grid=2)
    out4 = jax.block_until_ready(
        double_conv(x, *p1, residual=False, matmul_dtype=jnp.float32, block_b=1))
    assert jnp.allclose(out4, ref1, atol=2e-3, rtol=2e-3), "mismatch block_b=1"

    # Case 5: odd batch with batch padding (B=3, block_b=2 -> padded to 4)
    x5 = jax.random.normal(kx3, (3, Cin, H, W), jnp.float32)
    ref5 = _ref_double_conv(x5, *p1, residual=False)
    out5 = jax.block_until_ready(
        double_conv(x5, *p1, residual=False, matmul_dtype=jnp.float32, block_b=2))
    assert jnp.allclose(out5, ref5, atol=2e-3, rtol=2e-3), "mismatch padded batch"

    print("KERNEL_OK")
</pallas_src>

<mosaic_0001>
module attributes {stable_mosaic.version = 11 : i64} {
  func.func @double_conv_kernel(%arg0: i32, %arg1: memref<2x16x64xf32, #tpu.memory_space<vmem>>, %arg2: memref<3x64x128xf32, #tpu.memory_space<vmem>>, %arg3: memref<1x128xf32, #tpu.memory_space<vmem>>, %arg4: memref<1x128xf32, #tpu.memory_space<vmem>>, %arg5: memref<3x128x128xf32, #tpu.memory_space<vmem>>, %arg6: memref<1x128xf32, #tpu.memory_space<vmem>>, %arg7: memref<1x128xf32, #tpu.memory_space<vmem>>, %arg8: memref<2x16x128xf32, #tpu.memory_space<vmem>>) attributes {dimension_semantics = [#tpu.dimension_semantics<parallel>], iteration_bounds = array<i64: 1>, scalar_prefetch = 0 : i64, scratch_operands = 0 : i64, tpu.core_type = #tpu.core_type<tc>, window_params = [{transform_indices = @transform_0, window_bounds = array<i64: 2, 16, 64>}, {pipeline_mode = #tpu.pipeline_mode<synchronous>, transform_indices = @transform_1, window_bounds = array<i64: 3, 64, 128>}, {pipeline_mode = #tpu.pipeline_mode<synchronous>, transform_indices = @transform_2, window_bounds = array<i64: 1, 128>}, {pipeline_mode = #tpu.pipeline_mode<synchronous>, transform_indices = @transform_3, window_bounds = array<i64: 1, 128>}, {pipeline_mode = #tpu.pipeline_mode<synchronous>, transform_indices = @transform_4, window_bounds = array<i64: 3, 128, 128>}, {pipeline_mode = #tpu.pipeline_mode<synchronous>, transform_indices = @transform_5, window_bounds = array<i64: 1, 128>}, {pipeline_mode = #tpu.pipeline_mode<synchronous>, transform_indices = @transform_6, window_bounds = array<i64: 1, 128>}, {transform_indices = @transform_7, window_bounds = array<i64: 2, 16, 128>}]} {
    %c0 = arith.constant 0 : index
    %c0_0 = arith.constant 0 : index
    %c0_1 = arith.constant 0 : index
    %0 = vector.load %arg1[%c0, %c0_0, %c0_1] : memref<2x16x64xf32, #tpu.memory_space<vmem>>, vector<2x16x64xf32>
    %1 = vector.shape_cast %0 : vector<2x16x64xf32> to vector<32x64xf32>
    %2 = tpu.iota {dimensions = array<i32: 0>} : vector<32x1xi32>
    %c16_i32 = arith.constant 16 : i32
    %c0_i32 = arith.constant 0 : i32
    %3 = arith.cmpi eq, %c16_i32, %c0_i32 : i32
    %c1_i32 = arith.constant 1 : i32
    %4 = arith.select %3, %c1_i32, %c16_i32 : i32
    %5 = vector.broadcast %4 : i32 to vector<32x1xi32>
    %6 = arith.remsi %2, %5 : vector<32x1xi32>
    %c0_i32_2 = arith.constant 0 : i32
    %7 = vector.broadcast %c0_i32_2 : i32 to vector<32x1xi32>
    %8 = arith.cmpi ne, %6, %7 : vector<32x1xi32>
    %c0_i32_3 = arith.constant 0 : i32
    %9 = vector.broadcast %c0_i32_3 : i32 to vector<32x1xi32>
    %10 = arith.cmpi slt, %6, %9 : vector<32x1xi32>
    %c0_i32_4 = arith.constant 0 : i32
    %11 = arith.cmpi slt, %4, %c0_i32_4 : i32
    %12 = vector.broadcast %11 : i1 to vector<32x1xi1>
    %13 = vector.broadcast %12 : vector<32x1xi1> to vector<32x1xi1>
    %14 = arith.xori %10, %13 : vector<32x1xi1>
    %15 = arith.andi %14, %8 : vector<32x1xi1>
    %16 = vector.broadcast %4 : i32 to vector<32x1xi32>
    %17 = arith.addi %6, %16 : vector<32x1xi32>
    %18 = arith.select %15, %17, %6 : vector<32x1xi1>, vector<32x1xi32>
    %cst = arith.constant 0.000000e+00 : f32
    %19 = vector.broadcast %cst : f32 to vector<1x64xf32>
    %20 = vector.extract_strided_slice %1 {offsets = [0, 0], sizes = [31, 64], strides = [1, 1]} : vector<32x64xf32> to vector<31x64xf32>
    %21 = tpu.concatenate %19, %20 in 0 : vector<1x64xf32>, vector<31x64xf32> -> vector<32x64xf32>
    %c0_i32_5 = arith.constant 0 : i32
    %22 = vector.broadcast %c0_i32_5 : i32 to vector<32x1xi32>
    %23 = arith.cmpi ne, %18, %22 : vector<32x1xi32>
    %cst_6 = arith.constant 0.000000e+00 : f32
    %24 = vector.shape_cast %23 : vector<32x1xi1> to vector<32x1xi1>
    %25 = vector.broadcast %24 : vector<32x1xi1> to vector<32x64xi1>
    %26 = vector.broadcast %cst_6 : f32 to vector<32x64xf32>
    %27 = arith.select %25, %21, %26 : vector<32x64xi1>, vector<32x64xf32>
    %cst_7 = arith.constant 0.000000e+00 : f32
    %28 = vector.broadcast %cst_7 : f32 to vector<1x64xf32>
    %29 = vector.extract_strided_slice %1 {offsets = [1, 0], sizes = [31, 64], strides = [1, 1]} : vector<32x64xf32> to vector<31x64xf32>
    %30 = tpu.concatenate %29, %28 in 0 : vector<31x64xf32>, vector<1x64xf32> -> vector<32x64xf32>
    %c15_i32 = arith.constant 15 : i32
    %31 = vector.broadcast %c15_i32 : i32 to vector<32x1xi32>
    %32 = arith.cmpi ne, %18, %31 : vector<32x1xi32>
    %cst_8 = arith.constant 0.000000e+00 : f32
    %33 = vector.shape_cast %32 : vector<32x1xi1> to vector<32x1xi1>
    %34 = vector.broadcast %33 : vector<32x1xi1> to vector<32x64xi1>
    %35 = vector.broadcast %cst_8 : f32 to vector<32x64xf32>
    %36 = arith.select %34, %30, %35 : vector<32x64xi1>, vector<32x64xf32>
    %c0_9 = arith.constant 0 : index
    %c0_10 = arith.constant 0 : index
    %c0_11 = arith.constant 0 : index
    %37 = vector.load %arg2[%c0_9, %c0_10, %c0_11] : memref<3x64x128xf32, #tpu.memory_space<vmem>>, vector<1x64x128xf32>
    %38 = vector.shape_cast %37 : vector<1x64x128xf32> to vector<64x128xf32>
    %cst_12 = arith.constant dense<0.000000e+00> : vector<32x128xf32>
    %39 = tpu.matmul %27, %38, %cst_12 {dimension_numbers = #tpu.dot_dimension_numbers<[1], [0], [0], [1], [0, 0, 1, 1], [], []>} : vector<32x64xf32>, vector<64x128xf32>, vector<32x128xf32> -> vector<32x128xf32>
    %c1 = arith.constant 1 : index
    %c0_13 = arith.constant 0 : index
    %c0_14 = arith.constant 0 : index
    %40 = vector.load %arg2[%c1, %c0_13, %c0_14] : memref<3x64x128xf32, #tpu.memory_space<vmem>>, vector<1x64x128xf32>
    %41 = vector.shape_cast %40 : vector<1x64x128xf32> to vector<64x128xf32>
    %cst_15 = arith.constant dense<0.000000e+00> : vector<32x128xf32>
    %42 = tpu.matmul %1, %41, %cst_15 {dimension_numbers = #tpu.dot_dimension_numbers<[1], [0], [0], [1], [0, 0, 1, 1], [], []>} : vector<32x64xf32>, vector<64x128xf32>, vector<32x128xf32> -> vector<32x128xf32>
    %43 = arith.addf %39, %42 : vector<32x128xf32>
    %c2 = arith.constant 2 : index
    %c0_16 = arith.constant 0 : index
    %c0_17 = arith.constant 0 : index
    %44 = vector.load %arg2[%c2, %c0_16, %c0_17] : memref<3x64x128xf32, #tpu.memory_space<vmem>>, vector<1x64x128xf32>
    %45 = vector.shape_cast %44 : vector<1x64x128xf32> to vector<64x128xf32>
    %cst_18 = arith.constant dense<0.000000e+00> : vector<32x128xf32>
    %46 = tpu.matmul %36, %45, %cst_18 {dimension_numbers = #tpu.dot_dimension_numbers<[1], [0], [0], [1], [0, 0, 1, 1], [], []>} : vector<32x64xf32>, vector<64x128xf32>, vector<32x128xf32> -> vector<32x128xf32>
    %47 = arith.addf %43, %46 : vector<32x128xf32>
    %48 = vector.shape_cast %47 : vector<32x128xf32> to vector<2x16x128xf32>
    %cst_19 = arith.constant dense<0.000000e+00> : vector<2x16xf32>
    %49 = vector.multi_reduction <add>, %48, %cst_19 [2] : vector<2x16x128xf32> to vector<2x16xf32>
    %50 = vector.shape_cast %49 : vector<2x16xf32> to vector<2x16x1xf32>
    %cst_20 = arith.constant dense<0.000000e+00> : vector<2x1xf32>
    %51 = vector.multi_reduction <add>, %50, %cst_20 [1] : vector<2x16x1xf32> to vector<2x1xf32>
    %52 = vector.shape_cast %51 : vector<2x1xf32> to vector<2x1x1xf32>
    %cst_21 = arith.constant 4.8828125E-4 : f32
    %53 = vector.broadcast %cst_21 : f32 to vector<2x1x1xf32>
    %54 = arith.mulf %52, %53 : vector<2x1x1xf32>
    %55 = vector.broadcast %54 : vector<2x1x1xf32> to vector<2x16x128xf32>
    %56 = arith.subf %48, %55 : vector<2x16x128xf32>
    %57 = arith.mulf %56, %56 : vector<2x16x128xf32>
    %cst_22 = arith.constant dense<0.000000e+00> : vector<2x16xf32>
    %58 = vector.multi_reduction <add>, %57, %cst_22 [2] : vector<2x16x128xf32> to vector<2x16xf32>
    %59 = vector.shape_cast %58 : vector<2x16xf32> to vector<2x16x1xf32>
    %cst_23 = arith.constant dense<0.000000e+00> : vector<2x1xf32>
    %60 = vector.multi_reduction <add>, %59, %cst_23 [1] : vector<2x16x1xf32> to vector<2x1xf32>
    %61 = vector.shape_cast %60 : vector<2x1xf32> to vector<2x1x1xf32>
    %cst_24 = arith.constant 4.8828125E-4 : f32
    %62 = vector.broadcast %cst_24 : f32 to vector<2x1x1xf32>
    %63 = arith.mulf %61, %62 : vector<2x1x1xf32>
    %cst_25 = arith.constant 9.99999974E-6 : f32
    %64 = vector.broadcast %cst_25 : f32 to vector<2x1x1xf32>
    %65 = arith.addf %63, %64 : vector<2x1x1xf32>
    %66 = math.rsqrt %65 : vector<2x1x1xf32>
    %c0_26 = arith.constant 0 : index
    %c0_27 = arith.constant 0 : index
    %67 = vector.load %arg3[%c0_26, %c0_27] : memref<1x128xf32, #tpu.memory_space<vmem>>, vector<1x128xf32>
    %68 = vector.shape_cast %67 : vector<1x128xf32> to vector<1x1x128xf32>
    %69 = vector.broadcast %68 : vector<1x1x128xf32> to vector<2x1x128xf32>
    %70 = vector.broadcast %66 : vector<2x1x1xf32> to vector<2x1x128xf32>
    %71 = arith.mulf %69, %70 : vector<2x1x128xf32>
    %c0_28 = arith.constant 0 : index
    %c0_29 = arith.constant 0 : index
    %72 = vector.load %arg4[%c0_28, %c0_29] : memref<1x128xf32, #tpu.memory_space<vmem>>, vector<1x128xf32>
    %73 = vector.shape_cast %72 : vector<1x128xf32> to vector<1x1x128xf32>
    %74 = vector.broadcast %54 : vector<2x1x1xf32> to vector<2x1x128xf32>
    %75 = arith.mulf %74, %71 : vector<2x1x128xf32>
    %76 = vector.broadcast %73 : vector<1x1x128xf32> to vector<2x1x128xf32>
    %77 = arith.subf %76, %75 : vector<2x1x128xf32>
    %78 = vector.broadcast %71 : vector<2x1x128xf32> to vector<2x16x128xf32>
    %79 = arith.mulf %48, %78 : vector<2x16x128xf32>
    %80 = vector.broadcast %77 : vector<2x1x128xf32> to vector<2x16x128xf32>
    %81 = arith.addf %79, %80 : vector<2x16x128xf32>
    %82 = vector.shape_cast %81 : vector<2x16x128xf32> to vector<32x128xf32>
    %cst_30 = arith.constant 5.000000e-01 : f32
    %83 = vector.broadcast %cst_30 : f32 to vector<32x128xf32>
    %84 = arith.mulf %83, %82 : vector<32x128xf32>
    %cst_31 = arith.constant 0.707106769 : f32
    %85 = vector.broadcast %cst_31 : f32 to vector<32x128xf32>
    %86 = arith.mulf %82, %85 : vector<32x128xf32>
    %87 = math.erf %86 : vector<32x128xf32>
    %cst_32 = arith.constant 1.000000e+00 : f32
    %88 = vector.broadcast %cst_32 : f32 to vector<32x128xf32>
    %89 = arith.addf %88, %87 : vector<32x128xf32>
    %90 = arith.mulf %84, %89 : vector<32x128xf32>
    %cst_33 = arith.constant 0.000000e+00 : f32
    %91 = vector.broadcast %cst_33 : f32 to vector<1x128xf32>
    %92 = vector.extract_strided_slice %90 {offsets = [0, 0], sizes = [31, 128], strides = [1, 1]} : vector<32x128xf32> to vector<31x128xf32>
    %93 = tpu.concatenate %91, %92 in 0 : vector<1x128xf32>, vector<31x128xf32> -> vector<32x128xf32>
    %c0_i32_34 = arith.constant 0 : i32
    %94 = vector.broadcast %c0_i32_34 : i32 to vector<32x1xi32>
    %95 = arith.cmpi ne, %18, %94 : vector<32x1xi32>
    %cst_35 = arith.constant 0.000000e+00 : f32
    %96 = vector.shape_cast %95 : vector<32x1xi1> to vector<32x1xi1>
    %97 = vector.broadcast %96 : vector<32x1xi1> to vector<32x128xi1>
    %98 = vector.broadcast %cst_35 : f32 to vector<32x128xf32>
    %99 = arith.select %97, %93, %98 : vector<32x128xi1>, vector<32x128xf32>
    %cst_36 = arith.constant 0.000000e+00 : f32
    %100 = vector.broadcast %cst_36 : f32 to vector<1x128xf32>
    %101 = vector.extract_strided_slice %90 {offsets = [1, 0], sizes = [31, 128], strides = [1, 1]} : vector<32x128xf32> to vector<31x128xf32>
    %102 = tpu.concatenate %101, %100 in 0 : vector<31x128xf32>, vector<1x128xf32> -> vector<32x128xf32>
    %c15_i32_37 = arith.constant 15 : i32
    %103 = vector.broadcast %c15_i32_37 : i32 to vector<32x1xi32>
    %104 = arith.cmpi ne, %18, %103 : vector<32x1xi32>
    %cst_38 = arith.constant 0.000000e+00 : f32
    %105 = vector.shape_cast %104 : vector<32x1xi1> to vector<32x1xi1>
    %106 = vector.broadcast %105 : vector<32x1xi1> to vector<32x128xi1>
    %107 = vector.broadcast %cst_38 : f32 to vector<32x128xf32>
    %108 = arith.select %106, %102, %107 : vector<32x128xi1>, vector<32x128xf32>
    %c0_39 = arith.constant 0 : index
    %c0_40 = arith.constant 0 : index
    %c0_41 = arith.constant 0 : index
    %109 = vector.load %arg5[%c0_39, %c0_40, %c0_41] : memref<3x128x128xf32, #tpu.memory_space<vmem>>, vector<1x128x128xf32>
    %110 = vector.shape_cast %109 : vector<1x128x128xf32> to vector<128x128xf32>
    %cst_42 = arith.constant dense<0.000000e+00> : vector<32x128xf32>
    %111 = tpu.matmul %99, %110, %cst_42 {dimension_numbers = #tpu.dot_dimension_numbers<[1], [0], [0], [1], [0, 0, 1, 1], [], []>} : vector<32x128xf32>, vector<128x128xf32>, vector<32x128xf32> -> vector<32x128xf32>
    %c1_43 = arith.constant 1 : index
    %c0_44 = arith.constant 0 : index
    %c0_45 = arith.constant 0 : index
    %112 = vector.load %arg5[%c1_43, %c0_44, %c0_45] : memref<3x128x128xf32, #tpu.memory_space<vmem>>, vector<1x128x128xf32>
    %113 = vector.shape_cast %112 : vector<1x128x128xf32> to vector<128x128xf32>
    %cst_46 = arith.constant dense<0.000000e+00> : vector<32x128xf32>
    %114 = tpu.matmul %90, %113, %cst_46 {dimension_numbers = #tpu.dot_dimension_numbers<[1], [0], [0], [1], [0, 0, 1, 1], [], []>} : vector<32x128xf32>, vector<128x128xf32>, vector<32x128xf32> -> vector<32x128xf32>
    %115 = arith.addf %111, %114 : vector<32x128xf32>
    %c2_47 = arith.constant 2 : index
    %c0_48 = arith.constant 0 : index
    %c0_49 = arith.constant 0 : index
    %116 = vector.load %arg5[%c2_47, %c0_48, %c0_49] : memref<3x128x128xf32, #tpu.memory_space<vmem>>, vector<1x128x128xf32>
    %117 = vector.shape_cast %116 : vector<1x128x128xf32> to vector<128x128xf32>
    %cst_50 = arith.constant dense<0.000000e+00> : vector<32x128xf32>
    %118 = tpu.matmul %108, %117, %cst_50 {dimension_numbers = #tpu.dot_dimension_numbers<[1], [0], [0], [1], [0, 0, 1, 1], [], []>} : vector<32x128xf32>, vector<128x128xf32>, vector<32x128xf32> -> vector<32x128xf32>
    %119 = arith.addf %115, %118 : vector<32x128xf32>
    %120 = vector.shape_cast %119 : vector<32x128xf32> to vector<2x16x128xf32>
    %cst_51 = arith.constant dense<0.000000e+00> : vector<2x16xf32>
    %121 = vector.multi_reduction <add>, %120, %cst_51 [2] : vector<2x16x128xf32> to vector<2x16xf32>
    %122 = vector.shape_cast %121 : vector<2x16xf32> to vector<2x16x1xf32>
    %cst_52 = arith.constant dense<0.000000e+00> : vector<2x1xf32>
    %123 = vector.multi_reduction <add>, %122, %cst_52 [1] : vector<2x16x1xf32> to vector<2x1xf32>
    %124 = vector.shape_cast %123 : vector<2x1xf32> to vector<2x1x1xf32>
    %cst_53 = arith.constant 4.8828125E-4 : f32
    %125 = vector.broadcast %cst_53 : f32 to vector<2x1x1xf32>
    %126 = arith.mulf %124, %125 : vector<2x1x1xf32>
    %127 = vector.broadcast %126 : vector<2x1x1xf32> to vector<2x16x128xf32>
    %128 = arith.subf %120, %127 : vector<2x16x128xf32>
    %129 = arith.mulf %128, %128 : vector<2x16x128xf32>
    %cst_54 = arith.constant dense<0.000000e+00> : vector<2x16xf32>
    %130 = vector.multi_reduction <add>, %129, %cst_54 [2] : vector<2x16x128xf32> to vector<2x16xf32>
    %131 = vector.shape_cast %130 : vector<2x16xf32> to vector<2x16x1xf32>
    %cst_55 = arith.constant dense<0.000000e+00> : vector<2x1xf32>
    %132 = vector.multi_reduction <add>, %131, %cst_55 [1] : vector<2x16x1xf32> to vector<2x1xf32>
    %133 = vector.shape_cast %132 : vector<2x1xf32> to vector<2x1x1xf32>
    %cst_56 = arith.constant 4.8828125E-4 : f32
    %134 = vector.broadcast %cst_56 : f32 to vector<2x1x1xf32>
    %135 = arith.mulf %133, %134 : vector<2x1x1xf32>
    %cst_57 = arith.constant 9.99999974E-6 : f32
    %136 = vector.broadcast %cst_57 : f32 to vector<2x1x1xf32>
    %137 = arith.addf %135, %136 : vector<2x1x1xf32>
    %138 = math.rsqrt %137 : vector<2x1x1xf32>
    %c0_58 = arith.constant 0 : index
    %c0_59 = arith.constant 0 : index
    %139 = vector.load %arg6[%c0_58, %c0_59] : memref<1x128xf32, #tpu.memory_space<vmem>>, vector<1x128xf32>
    %140 = vector.shape_cast %139 : vector<1x128xf32> to vector<1x1x128xf32>
    %141 = vector.broadcast %140 : vector<1x1x128xf32> to vector<2x1x128xf32>
    %142 = vector.broadcast %138 : vector<2x1x1xf32> to vector<2x1x128xf32>
    %143 = arith.mulf %141, %142 : vector<2x1x128xf32>
    %c0_60 = arith.constant 0 : index
    %c0_61 = arith.constant 0 : index
    %144 = vector.load %arg7[%c0_60, %c0_61] : memref<1x128xf32, #tpu.memory_space<vmem>>, vector<1x128xf32>
    %145 = vector.shape_cast %144 : vector<1x128xf32> to vector<1x1x128xf32>
    %146 = vector.broadcast %126 : vector<2x1x1xf32> to vector<2x1x128xf32>
    %147 = arith.mulf %146, %143 : vector<2x1x128xf32>
    %148 = vector.broadcast %145 : vector<1x1x128xf32> to vector<2x1x128xf32>
    %149 = arith.subf %148, %147 : vector<2x1x128xf32>
    %150 = vector.broadcast %143 : vector<2x1x128xf32> to vector<2x16x128xf32>
    %151 = arith.mulf %120, %150 : vector<2x16x128xf32>
    %152 = vector.broadcast %149 : vector<2x1x128xf32> to vector<2x16x128xf32>
    %153 = arith.addf %151, %152 : vector<2x16x128xf32>
    %154 = vector.shape_cast %153 : vector<2x16x128xf32> to vector<32x128xf32>
    %155 = vector.shape_cast %154 : vector<32x128xf32> to vector<2x16x128xf32>
    %c0_62 = arith.constant 0 : index
    %c0_63 = arith.constant 0 : index
    %c0_64 = arith.constant 0 : index
    %156 = vector.load %arg8[%c0_62, %c0_63, %c0_64] : memref<2x16x128xf32, #tpu.memory_space<vmem>>, vector<2x16x128xf32>
    tpu.vector_store %arg8[%c0_62, %c0_63, %c0_64], %155 {strides = array<i32>} : memref<2x16x128xf32, #tpu.memory_space<vmem>>, vector<2x16x128xf32>,
    return
  }
  func.func @transform_0(%arg0: i32) -> (i32, i32, i32) {
    %c0_i32 = arith.constant 0 : i32
    %c0_i32_0 = arith.constant 0 : i32
    %c0_i32_1 = arith.constant 0 : i32
    return %arg0, %c0_i32, %c0_i32_0 : i32, i32, i32
  }
  func.func @transform_1(%arg0: i32) -> (i32, i32, i32) {
    %c0_i32 = arith.constant 0 : i32
    %c0_i32_0 = arith.constant 0 : i32
    %c0_i32_1 = arith.constant 0 : i32
    %c0_i32_2 = arith.constant 0 : i32
    return %c0_i32, %c0_i32_0, %c0_i32_1 : i32, i32, i32
  }
  func.func @transform_2(%arg0: i32) -> (i32, i32) {
    %c0_i32 = arith.constant 0 : i32
    %c0_i32_0 = arith.constant 0 : i32
    %c0_i32_1 = arith.constant 0 : i32
    return %c0_i32, %c0_i32_0 : i32, i32
  }
  func.func @transform_3(%arg0: i32) -> (i32, i32) {
    %c0_i32 = arith.constant 0 : i32
    %c0_i32_0 = arith.constant 0 : i32
    %c0_i32_1 = arith.constant 0 : i32
    return %c0_i32, %c0_i32_0 : i32, i32
  }
  func.func @transform_4(%arg0: i32) -> (i32, i32, i32) {
    %c0_i32 = arith.constant 0 : i32
    %c0_i32_0 = arith.constant 0 : i32
    %c0_i32_1 = arith.constant 0 : i32
    %c0_i32_2 = arith.constant 0 : i32
    return %c0_i32, %c0_i32_0, %c0_i32_1 : i32, i32, i32
  }
  func.func @transform_5(%arg0: i32) -> (i32, i32) {
    %c0_i32 = arith.constant 0 : i32
    %c0_i32_0 = arith.constant 0 : i32
    %c0_i32_1 = arith.constant 0 : i32
    return %c0_i32, %c0_i32_0 : i32, i32
  }
  func.func @transform_6(%arg0: i32) -> (i32, i32) {
    %c0_i32 = arith.constant 0 : i32
    %c0_i32_0 = arith.constant 0 : i32
    %c0_i32_1 = arith.constant 0 : i32
    return %c0_i32, %c0_i32_0 : i32, i32
  }
  func.func @transform_7(%arg0: i32) -> (i32, i32, i32) {
    %c0_i32 = arith.constant 0 : i32
    %c0_i32_0 = arith.constant 0 : i32
    %c0_i32_1 = arith.constant 0 : i32
    return %arg0, %c0_i32, %c0_i32_0 : i32, i32, i32
  }
}

</mosaic_0001>

<llo_original>
// kernel: tpu_custom_call.1
$region0: #{tpu_custom_call.1}
  #allocation0 [shape = 'u32[]', space=smem, size = 0x4, offset = 0x4, fixed_abs, tag = 'smem constant byte address 0x4 - core index']
  #allocation1 [shape = 'u32[72,128]{1,0:T(1,128)}', space=vmem, size = 0x9000, scoped, tag = 'internal scratch']
  %s0 = inlined_call_operand.hbm [shape: f32[2,16,64], index: 0, kind: input, shape index: {}]
  %s1 = inlined_call_operand.hbm [shape: f32[3,64,128], index: 1, kind: input, shape index: {}]
  %s2 = inlined_call_operand.vmem [shape: f32[1,128], index: 2, kind: input, shape index: {}]
  %s3 = inlined_call_operand.vmem [shape: f32[1,128], index: 3, kind: input, shape index: {}]
  %s4 = inlined_call_operand.hbm [shape: f32[3,128,128], index: 4, kind: input, shape index: {}]
  %s5 = inlined_call_operand.vmem [shape: f32[1,128], index: 5, kind: input, shape index: {}]
  %s6 = inlined_call_operand.vmem [shape: f32[1,128], index: 6, kind: input, shape index: {}]
  %s7 = inlined_call_operand.hbm [shape: f32[2,16,128], index: 7, kind: output, shape index: {}]
  %s8 = sld [smem:[#allocation0]]
  $region50: #{tpu_custom_call.1} parent=0
    _
  %s10 = ssub.s32 1, %s8
  %s11 = scalar_select 0, %s10, %s8
  $region1: #{tpu_custom_call.1} parent=0
    #allocation2 [shape = 'u8[16384]{0}', space=vmem, size = 0x4000, scoped, tag = 'input window, operand 0, single buffered']
    #allocation3 [shape = 's32[1]{0}', space=sflag, size = 0x4, scoped, tag = 'scoped memory for tpu_custom_call.1']
    #allocation4 [shape = 's32[1]{0}', space=sflag, size = 0x4, scoped, tag = 'scoped memory for tpu_custom_call.1']
    #allocation5 [shape = 'u8[98304]{0}', space=vmem, size = 0x18000, scoped, tag = 'input window, operand 1, single buffered']
    #allocation6 [shape = 's32[1]{0}', space=sflag, size = 0x4, scoped, tag = 'scoped memory for tpu_custom_call.1']
    #allocation7 [shape = 'u8[196608]{0}', space=vmem, size = 0x30000, scoped, tag = 'input window, operand 4, single buffered']
    #allocation8 [shape = 'u8[16384]{0}', space=vmem, size = 0x4000, scoped, tag = 'output window, operand 0, single buffered']
    %12 = vsyncpa [#allocation3], 0
    %13 = vsyncpa [#allocation6], 0
    %14 = vsyncpa [#allocation4], 0
    // Predicated region
    $region2: #{tpu_custom_call.1} parent=1 // pred_check
      _
    $region3: #{tpu_custom_call.1} parent=1 // pred_check_branch
      %16 = sbr.rel (0) target = $region5
    $region4: #{tpu_custom_call.1} parent=1 // pred_region
      %18 = vsyncadd [#allocation3], 0
      %s19 = sshll.u32 %s0, 4
      %s20 = int_to_ptr.hbm [resolvable:$true] %s19
      %s21 = sshll.u32 [#allocation2], 4
      %s22 = int_to_ptr.vmem [resolvable:$true] %s21
      %27 = dma.hbm_to_vmem [thread:$0]  %s20, 512, %s22, [#allocation3], 128, 128, 8
    $region5: #{tpu_custom_call.1} parent=1 // pred_fallthru
      _
    // Predicated region
    $region6: #{tpu_custom_call.1} parent=1 // pred_check
      _
    $region7: #{tpu_custom_call.1} parent=1 // pred_check_branch
      %29 = sbr.rel (0) target = $region9
    $region8: #{tpu_custom_call.1} parent=1 // pred_region
      %31 = vsyncadd [#allocation6], 0
      %s32 = sshll.u32 %s1, 4
      %s33 = int_to_ptr.hbm [resolvable:$true] %s32
      %s34 = sshll.u32 [#allocation5], 4
      %s35 = int_to_ptr.vmem [resolvable:$true] %s34
      %40 = dma.hbm_to_vmem [thread:$0]  %s33, 3072, %s35, [#allocation6], 128, 128, 8
    $region9: #{tpu_custom_call.1} parent=1 // pred_fallthru
      _
    // Predicated region
    $region10: #{tpu_custom_call.1} parent=1 // pred_check
      _
    $region11: #{tpu_custom_call.1} parent=1 // pred_check_branch
      %42 = sbr.rel (0) target = $region13
    $region12: #{tpu_custom_call.1} parent=1 // pred_region
      _
    $region13: #{tpu_custom_call.1} parent=1 // pred_fallthru
      _
    // Predicated region
    $region14: #{tpu_custom_call.1} parent=1 // pred_check
      _
    $region15: #{tpu_custom_call.1} parent=1 // pred_check_branch
      %44 = sbr.rel (0) target = $region17
    $region16: #{tpu_custom_call.1} parent=1 // pred_region
      _
    $region17: #{tpu_custom_call.1} parent=1 // pred_fallthru
      _
    // Predicated region
    $region18: #{tpu_custom_call.1} parent=1 // pred_check
      _
    $region19: #{tpu_custom_call.1} parent=1 // pred_check_branch
      %46 = sbr.rel (0) target = $region21
    $region20: #{tpu_custom_call.1} parent=1 // pred_region
      %48 = vsyncadd [#allocation6], 0
      %s49 = sshll.u32 %s4, 4
      %s50 = int_to_ptr.hbm [resolvable:$true] %s49
      %s51 = sshll.u32 [#allocation7], 4
      %s52 = int_to_ptr.vmem [resolvable:$true] %s51
      %57 = dma.hbm_to_vmem [thread:$0]  %s50, 6144, %s52, [#allocation6], 128, 128, 8
    $region21: #{tpu_custom_call.1} parent=1 // pred_fallthru
      _
    // Predicated region
    $region22: #{tpu_custom_call.1} parent=1 // pred_check
      _
    $region23: #{tpu_custom_call.1} parent=1 // pred_check_branch
      %59 = sbr.rel (0) target = $region25
    $region24: #{tpu_custom_call.1} parent=1 // pred_region
      _
    $region25: #{tpu_custom_call.1} parent=1 // pred_fallthru
      _
    // Predicated region
    $region26: #{tpu_custom_call.1} parent=1 // pred_check
      _
    $region27: #{tpu_custom_call.1} parent=1 // pred_check_branch
      %61 = sbr.rel (0) target = $region29
    $region28: #{tpu_custom_call.1} parent=1 // pred_region
      _
    $region29: #{tpu_custom_call.1} parent=1 // pred_fallthru
      _
    // Predicated region
    $region30: #{tpu_custom_call.1} parent=1 // pred_check
      _
    $region31: #{tpu_custom_call.1} parent=1 // pred_check_branch
      %63 = sbr.rel (0) target = $region33
    $region32: #{tpu_custom_call.1} parent=1 // pred_region
      %65 = dma.done [#allocation3], 512
    $region33: #{tpu_custom_call.1} parent=1 // pred_fallthru
      _
    // Predicated region
    $region34: #{tpu_custom_call.1} parent=1 // pred_check
      _
    $region35: #{tpu_custom_call.1} parent=1 // pred_check_branch
      %67 = sbr.rel (0) target = $region37
    $region36: #{tpu_custom_call.1} parent=1 // pred_region
      %69 = dma.done [#allocation6], 3072
    $region37: #{tpu_custom_call.1} parent=1 // pred_fallthru
      _
    // Predicated region
    $region38: #{tpu_custom_call.1} parent=1 // pred_check
      _
    $region39: #{tpu_custom_call.1} parent=1 // pred_check_branch
      %71 = sbr.rel (0) target = $region41
    $region40: #{tpu_custom_call.1} parent=1 // pred_region
      %73 = dma.done [#allocation6], 6144
    $region41: #{tpu_custom_call.1} parent=1 // pred_fallthru
      _
    %v74 = vld [vmem:[#allocation2] sm:$0xff]
    %v75 = vld [vmem:[#allocation2 + $0x8] sm:$0xff]
    %v76 = vld [vmem:[#allocation2 + $0x10] sm:$0xff]
    %v77 = vld [vmem:[#allocation2 + $0x18] sm:$0xff]
    %v78 = vlaneseq
    %v79 = vshrl.u32 %v78, 7
    %v80 = vadd.s32 %v79, 8
    %v81 = vadd.s32 %v79, 16
    %v82 = vadd.s32 %v79, 24
    %vm83 = vcmp.lt.s32.totalorder %v79, 0
    %v84 = vsub.s32 0, %v79
    %v85 = vsel %vm83, %v84, %v79
    %v86 = vshrl.u32 %v85, 4
    %v87 = vand.u32 %v85, 15
    %v88 = vsub.s32 0, %v87
    %v89 = vsel %vm83, %v88, %v87
    %vm90 = vcmp.lt.s32.totalorder %v80, 0
    %v91 = vsub.s32 0, %v80
    %v92 = vsel %vm90, %v91, %v80
    %v93 = vshrl.u32 %v92, 4
    %v94 = vand.u32 %v92, 15
    %v95 = vsub.s32 0, %v94
    %v96 = vsel %vm90, %v95, %v94
    %vm97 = vcmp.lt.s32.totalorder %v81, 0
    %v98 = vsub.s32 0, %v81
    %v99 = vsel %vm97, %v98, %v81
    %v100 = vshrl.u32 %v99, 4
    %v101 = vand.u32 %v99, 15
    %v102 = vsub.s32 0, %v101
    %v103 = vsel %vm97, %v102, %v101
    %vm104 = vcmp.lt.s32.totalorder %v82, 0
    %v105 = vsub.s32 0, %v82
    %v106 = vsel %vm104, %v105, %v82
    %v107 = vshrl.u32 %v106, 4
    %v108 = vand.u32 %v106, 15
    %v109 = vsub.s32 0, %v108
    %v110 = vsel %vm104, %v109, %v108
    %vm111 = vcmp.ne.s32.totalorder %v89, 0
    %vm112 = vcmp.ne.s32.totalorder %v96, 0
    %vm113 = vcmp.ne.s32.totalorder %v103, 0
    %vm114 = vcmp.ne.s32.totalorder %v110, 0
    %vm115 = vcmp.lt.s32.totalorder %v89, 0
    %vm116 = vcmp.lt.s32.totalorder %v96, 0
    %vm117 = vcmp.lt.s32.totalorder %v103, 0
    %vm118 = vcmp.lt.s32.totalorder %v110, 0
    %vm119 = vmand %vm115, %vm111
    %vm120 = vmand %vm116, %vm112
    %vm121 = vmand %vm117, %vm113
    %vm122 = vmand %vm118, %vm114
    %v123 = vadd.s32 %v89, 16
    %v124 = vadd.s32 %v96, 16
    %v125 = vadd.s32 %v103, 16
    %v126 = vadd.s32 %v110, 16
    %v127 = vsel %vm119, %v123, %v89
    %v128 = vsel %vm120, %v124, %v96
    %v129 = vsel %vm121, %v125, %v103
    %v130 = vsel %vm122, %v126, %v110
    %vm135 = vcmask 1040384
    %v136 = vrot.slane %v74, 7
    %v137 = vrot.slane %v75, 7
    %v138 = vsel %vm135, %v136, %v137
    %v139 = vrot.slane %v76, 7
    %v140 = vsel %vm135, %v137, %v139
    %v141 = vrot.slane %v77, 7
    %v142 = vsel %vm135, %v139, %v141
    %v147 = vsel %vm135, 0.0, %v136
    %vm148 = vcmp.ne.s32.totalorder %v127, 0
    %vm149 = vcmp.ne.s32.totalorder %v128, 0
    %vm150 = vcmp.ne.s32.totalorder %v129, 0
    %vm151 = vcmp.ne.s32.totalorder %v130, 0
    %v152 = vsel %vm148, 1, 0
    %v153 = vsel %vm149, 1, 0
    %v154 = vsel %vm150, 1, 0
    %v155 = vsel %vm151, 1, 0
    %vm156 = vcmp.eq.s32.totalorder %v152, 1
    %vm157 = vcmp.eq.s32.totalorder %v153, 1
    %vm158 = vcmp.eq.s32.totalorder %v154, 1
    %vm159 = vcmp.eq.s32.totalorder %v155, 1
    %v160 = vsel %vm156, %v147, 0.0
    %v161 = vsel %vm157, %v138, 0.0
    %v162 = vsel %vm158, %v140, 0.0
    %v163 = vsel %vm159, %v142, 0.0
    %vm164 = vcmask 1046528
    %v165 = vrot.slane %v74, 1
    %v166 = vrot.slane %v75, 1
    %v167 = vsel %vm164, %v165, %v166
    %v168 = vrot.slane %v76, 1
    %v169 = vsel %vm164, %v166, %v168
    %v170 = vrot.slane %v77, 1
    %v171 = vsel %vm164, %v168, %v170
    %v176 = vsel %vm164, %v170, 0.0
    %vm177 = vcmp.ne.s32.totalorder %v127, 15
    %vm178 = vcmp.ne.s32.totalorder %v128, 15
    %vm179 = vcmp.ne.s32.totalorder %v129, 15
    %vm180 = vcmp.ne.s32.totalorder %v130, 15
    %v181 = vsel %vm177, 1, 0
    %v182 = vsel %vm178, 1, 0
    %v183 = vsel %vm179, 1, 0
    %v184 = vsel %vm180, 1, 0
    %vm185 = vcmp.eq.s32.totalorder %v181, 1
    %vm186 = vcmp.eq.s32.totalorder %v182, 1
    %vm187 = vcmp.eq.s32.totalorder %v183, 1
    %vm188 = vcmp.eq.s32.totalorder %v184, 1
    %v189 = vsel %vm185, %v167, 0.0
    %v190 = vsel %vm186, %v169, 0.0
    %v191 = vsel %vm187, %v171, 0.0
    %v192 = vsel %vm188, %v176, 0.0
    %v193 = vld [vmem:[#allocation5] sm:$0xff]
    %v194 = vld [vmem:[#allocation5 + $0x8] sm:$0xff]
    %v195 = vld [vmem:[#allocation5 + $0x10] sm:$0xff]
    %v196 = vld [vmem:[#allocation5 + $0x18] sm:$0xff]
    %v197 = vld [vmem:[#allocation5 + $0x20] sm:$0xff]
    %v198 = vld [vmem:[#allocation5 + $0x28] sm:$0xff]
    %v199 = vld [vmem:[#allocation5 + $0x30] sm:$0xff]
    %v200 = vld [vmem:[#allocation5 + $0x38] sm:$0xff]
    %s201 = scalar_lea.vmem [#allocation5], 64
    %v202 = vld [vmem:[%s201] sm:$0xff]
    %v203 = vld [vmem:[%s201 + $0x8] sm:$0xff]
    %v204 = vld [vmem:[%s201 + $0x10] sm:$0xff]
    %v205 = vld [vmem:[%s201 + $0x18] sm:$0xff]
    %v206 = vld [vmem:[%s201 + $0x20] sm:$0xff]
    %v207 = vld [vmem:[%s201 + $0x28] sm:$0xff]
    %v208 = vld [vmem:[%s201 + $0x30] sm:$0xff]
    %v209 = vld [vmem:[%s201 + $0x38] sm:$0xff]
    %vm210 = vcmask 523264
    %v211 = vsel %vm210, %v74, 0
    %v213 = vsel %vm210, %v75, 0
    %v215 = vsel %vm210, %v76, 0
    %v217 = vsel %vm210, %v77, 0
    %219 = vmatpush.msra.mxu0 0.0
    %220 = vmatpush.msra.mxu0 0.0
    %221 = vmatpush.msra.mxu0 0.0
    %222 = vmatpush.msra.mxu0 0.0
    %223 = vmatpush.msra.mxu0 0.0
    %224 = vmatpush.msra.mxu0 0.0
    %225 = vmatpush.msra.mxu0 0.0
    %226 = vmatpush.msra.mxu0 0.0
    %227 = vmatpush.msra.mxu0 %v209
    %228 = vmatpush.msra.mxu0 %v208
    %229 = vmatpush.msra.mxu0 %v207
    %230 = vmatpush.msra.mxu0 %v206
    %231 = vmatpush.msra.mxu0 %v205
    %232 = vmatpush.msra.mxu0 %v204
    %233 = vmatpush.msra.mxu0 %v203
    %234 = vmatpush.msra.mxu0 %v202
    %235 = vmatmul.f32.gmra.mxu0 %v211
    %v236 = vpop.f32.mrf.mxu0
    %v237 = vadd.f32 0.0, %v236
    %238 = vmatmul.f32.gmra.mxu0 %v213
    %v239 = vpop.f32.mrf.mxu0
    %v240 = vadd.f32 0.0, %v239
    %241 = vmatmul.f32.gmra.mxu0 %v215
    %v242 = vpop.f32.mrf.mxu0
    %v243 = vadd.f32 0.0, %v242
    %244 = vmatmul.f32.gmra.mxu0 %v217
    %v245 = vpop.f32.mrf.mxu0
    %v246 = vadd.f32 0.0, %v245
    %247 = vdwg.mxu0
    %v249 = vsel %vm210, %v160, 0
    %v252 = vsel %vm210, %v161, 0
    %v255 = vsel %vm210, %v162, 0
    %v258 = vsel %vm210, %v163, 0
    %260 = vmatpush.msra.mxu0 0.0
    %261 = vmatpush.msra.mxu0 0.0
    %262 = vmatpush.msra.mxu0 0.0
    %263 = vmatpush.msra.mxu0 0.0
    %264 = vmatpush.msra.mxu0 0.0
    %265 = vmatpush.msra.mxu0 0.0
    %266 = vmatpush.msra.mxu0 0.0
    %267 = vmatpush.msra.mxu0 0.0
    %268 = vmatpush.msra.mxu0 %v200
    %269 = vmatpush.msra.mxu0 %v199
    %270 = vmatpush.msra.mxu0 %v198
    %271 = vmatpush.msra.mxu0 %v197
    %272 = vmatpush.msra.mxu0 %v196
    %273 = vmatpush.msra.mxu0 %v195
    %274 = vmatpush.msra.mxu0 %v194
    %275 = vmatpush.msra.mxu0 %v193
    %276 = vmatmul.f32.gmra.mxu0 %v249
    %v277 = vpop.f32.mrf.mxu0
    %v278 = vadd.f32 %v237, %v277
    %279 = vmatmul.f32.gmra.mxu0 %v252
    %v280 = vpop.f32.mrf.mxu0
    %v281 = vadd.f32 %v240, %v280
    %282 = vmatmul.f32.gmra.mxu0 %v255
    %v283 = vpop.f32.mrf.mxu0
    %v284 = vadd.f32 %v243, %v283
    %285 = vmatmul.f32.gmra.mxu0 %v258
    %v286 = vpop.f32.mrf.mxu0
    %v287 = vadd.f32 %v246, %v286
    %288 = vdwg.mxu0
    %s289 = scalar_lea.vmem [#allocation5], 128
    %v290 = vld [vmem:[%s289] sm:$0xff]
    %v291 = vld [vmem:[%s289 + $0x8] sm:$0xff]
    %v292 = vld [vmem:[%s289 + $0x10] sm:$0xff]
    %v293 = vld [vmem:[%s289 + $0x18] sm:$0xff]
    %v294 = vld [vmem:[%s289 + $0x20] sm:$0xff]
    %v295 = vld [vmem:[%s289 + $0x28] sm:$0xff]
    %v296 = vld [vmem:[%s289 + $0x30] sm:$0xff]
    %v297 = vld [vmem:[%s289 + $0x38] sm:$0xff]
    %v299 = vsel %vm210, %v189, 0
    %v302 = vsel %vm210, %v190, 0
    %v305 = vsel %vm210, %v191, 0
    %v308 = vsel %vm210, %v192, 0
    %310 = vmatpush.msra.mxu0 0.0
    %311 = vmatpush.msra.mxu0 0.0
    %312 = vmatpush.msra.mxu0 0.0
    %313 = vmatpush.msra.mxu0 0.0
    %314 = vmatpush.msra.mxu0 0.0
    %315 = vmatpush.msra.mxu0 0.0
    %316 = vmatpush.msra.mxu0 0.0
    %317 = vmatpush.msra.mxu0 0.0
    %318 = vmatpush.msra.mxu0 %v297
    %319 = vmatpush.msra.mxu0 %v296
    %320 = vmatpush.msra.mxu0 %v295
    %321 = vmatpush.msra.mxu0 %v294
    %322 = vmatpush.msra.mxu0 %v293
    %323 = vmatpush.msra.mxu0 %v292
    %324 = vmatpush.msra.mxu0 %v291
    %325 = vmatpush.msra.mxu0 %v290
    %326 = vmatmul.f32.gmra.mxu0 %v299
    %v327 = vpop.f32.mrf.mxu0
    %v328 = vadd.f32 0.0, %v327
    %329 = vmatmul.f32.gmra.mxu0 %v302
    %v330 = vpop.f32.mrf.mxu0
    %v331 = vadd.f32 0.0, %v330
    %332 = vmatmul.f32.gmra.mxu0 %v305
    %v333 = vpop.f32.mrf.mxu0
    %v334 = vadd.f32 0.0, %v333
    %335 = vmatmul.f32.gmra.mxu0 %v308
    %v336 = vpop.f32.mrf.mxu0
    %v337 = vadd.f32 0.0, %v336
    %338 = vdwg.mxu0
    %v339 = vadd.f32 %v278, %v328
    %v340 = vadd.f32 %v281, %v331
    %v341 = vadd.f32 %v284, %v334
    %v342 = vadd.f32 %v287, %v337
    %343 = vadd.xlane.f32.xlu0 %v339
    %v344 = vpop.xlane.xlu0 %343
    %345 = vadd.xlane.f32.xlu0 %v340
    %v346 = vpop.xlane.xlu0 %345
    %347 = vadd.xlane.f32.xlu0 %v341
    %v348 = vpop.xlane.xlu0 %347
    %349 = vadd.xlane.f32.xlu0 %v342
    %v350 = vpop.xlane.xlu0 %349
    %v351 = vadd.f32 %v344, %v346
    %v352 = vrot.slane %v351, 4
    %v353 = vadd.f32 %v351, %v352
    %v354 = vrot.slane %v353, 2
    %v355 = vadd.f32 %v353, %v354
    %v356 = vrot.slane %v355, 1
    %v357 = vadd.f32 %v355, %v356
    %v358 = vadd.f32 %v348, %v350
    %v359 = vrot.slane %v358, 4
    %v360 = vadd.f32 %v358, %v359
    %v361 = vrot.slane %v360, 2
    %v362 = vadd.f32 %v360, %v361
    %v363 = vrot.slane %v362, 1
    %v364 = vadd.f32 %v362, %v363
    %v365 = vmul.f32 %v357, 0.00048828125
    %v366 = vmul.f32 %v364, 0.00048828125
    %v367 = vsub.f32 %v339, %v365
    %v368 = vsub.f32 %v340, %v365
    %v369 = vsub.f32 %v341, %v366
    %v370 = vsub.f32 %v342, %v366
    %v371 = vmul.f32 %v367, %v367
    %v372 = vmul.f32 %v368, %v368
    %v373 = vmul.f32 %v369, %v369
    %v374 = vmul.f32 %v370, %v370
    %375 = vadd.xlane.f32.xlu0 %v371
    %v376 = vpop.xlane.xlu0 %375
    %377 = vadd.xlane.f32.xlu0 %v372
    %v378 = vpop.xlane.xlu0 %377
    %379 = vadd.xlane.f32.xlu0 %v373
    %v380 = vpop.xlane.xlu0 %379
    %381 = vadd.xlane.f32.xlu0 %v374
    %v382 = vpop.xlane.xlu0 %381
    %v383 = vadd.f32 %v376, %v378
    %v384 = vrot.slane %v383, 4
    %v385 = vadd.f32 %v383, %v384
    %v386 = vrot.slane %v385, 2
    %v387 = vadd.f32 %v385, %v386
    %v388 = vrot.slane %v387, 1
    %v389 = vadd.f32 %v387, %v388
    %v390 = vadd.f32 %v380, %v382
    %v391 = vrot.slane %v390, 4
    %v392 = vadd.f32 %v390, %v391
    %v393 = vrot.slane %v392, 2
    %v394 = vadd.f32 %v392, %v393
    %v395 = vrot.slane %v394, 1
    %v396 = vadd.f32 %v394, %v395
    %v397 = vmul.f32 %v389, 0.00048828125
    %v398 = vmul.f32 %v396, 0.00048828125
    %v399 = vadd.f32 %v397, 1e-05
    %v400 = vadd.f32 %v398, 1e-05
    %v401 = vrsqrt.pop %v399
    %v402 = vmul.f32 %v401, %v399
    %v403 = vmul.f32 %v402, %v401
    %v404 = vmul.f32 0.5, %v403
    %v405 = vsub.f32 1.5, %v404
    %v406 = vmul.f32 %v401, %v405
    %vm407 = vweird.f32 %v399
    %vm408 = vweird.f32 %v401
    %vm409 = vmor %vm407, %vm408
    %v410 = vsel %vm409, %v401, %v406
    %v411 = vrsqrt.pop %v400
    %v412 = vmul.f32 %v411, %v400
    %v413 = vmul.f32 %v412, %v411
    %v414 = vmul.f32 0.5, %v413
    %v415 = vsub.f32 1.5, %v414
    %v416 = vmul.f32 %v411, %v415
    %vm417 = vweird.f32 %v400
    %vm418 = vweird.f32 %v411
    %vm419 = vmor %vm417, %vm418
    %v420 = vsel %vm419, %v411, %v416
    %v421 = vld [vmem:[%s2] sm:$0x1]
    %v422 = vmul.f32 %v421, %v410
    %v423 = vmul.f32 %v421, %v420
    %v424 = vld [vmem:[%s3] sm:$0x1]
    %v425 = vmul.f32 %v365, %v422
    %v426 = vmul.f32 %v366, %v423
    %v427 = vsub.f32 %v424, %v425
    %v428 = vsub.f32 %v424, %v426
    %v431 = vperm.slane %v422, 0
    %v432 = vperm.slane %v423, 0
    %v435 = vmul.f32 %v339, %v431
    %v436 = vmul.f32 %v340, %v431
    %v437 = vmul.f32 %v341, %v432
    %v438 = vmul.f32 %v342, %v432
    %v441 = vperm.slane %v427, 0
    %v442 = vperm.slane %v428, 0
    %v445 = vadd.f32 %v435, %v441
    %v446 = vadd.f32 %v436, %v441
    %v447 = vadd.f32 %v437, %v442
    %v448 = vadd.f32 %v438, %v442
    %v449 = vmul.f32 %v445, 0.5
    %v450 = vmul.f32 %v446, 0.5
    %v451 = vmul.f32 %v447, 0.5
    %v452 = vmul.f32 %v448, 0.5
    %v453 = vmul.f32 %v445, 0.70710677
    %v454 = vmul.f32 %v446, 0.70710677
    %v455 = vmul.f32 %v447, 0.70710677
    %v456 = vmul.f32 %v448, 0.70710677
    %v457 = vmul.f32 %v453, %v453
    %v458 = vmin.f32 16.0, %v457
    %v459 = vmul.f32 %v458, 2.1237322e-06
    %v460 = vadd.f32 %v459, 0.00028619796
    %v461 = vmul.f32 %v458, %v460
    %v462 = vadd.f32 %v461, 0.0036580483
    %v463 = vmul.f32 %v458, %v462
    %v464 = vadd.f32 %v463, 0.05243302
    %v465 = vmul.f32 %v458, %v464
    %v466 = vadd.f32 %v465, 0.18741608
    %v467 = vmul.f32 %v458, %v466
    %v468 = vadd.f32 %v467, 1.1283791
    %v469 = vmul.f32 %v453, %v468
    %v470 = vmul.f32 %v458, 3.8918573e-05
    %v471 = vadd.f32 %v470, 0.001143296
    %v472 = vmul.f32 %v458, %v471
    %v473 = vadd.f32 %v472, 0.014752088
    %v474 = vmul.f32 %v458, %v473
    %v475 = vadd.f32 %v474, 0.112945676
    %v476 = vmul.f32 %v458, %v475
    %v477 = vadd.f32 %v476, 0.4994258
    %v478 = vmul.f32 %v458, %v477
    %v479 = vadd.f32 %v478, 1.0
    %v480 = vrcp.pop %v479
    %v481 = vmul.f32 %v479, %v480
    %v482 = vsub.f32 1.0, %v481
    %v483 = vmul.f32 %v480, %v482
    %v484 = vadd.f32 %v480, %v483
    %vm485 = vweird.f32 %v479
    %vm486 = vweird.f32 %v480
    %vm487 = vmor %vm485, %vm486
    %v488 = vsel %vm487, %v480, %v484
    %v489 = vand.u32 2147483647, %v479
    %vm490 = vcmp.eq.f32.partialorder %v489, 8.507059e+37
    %v491 = vand.u32 %v479, 2147483648
    %v492 = vor.u32 1.1754944e-38, %v491
    %v493 = vsel %vm490, %v492, %v488
    %v494 = vmul.f32 %v469, %v493
    %v495 = vmin.f32 %v494, 1.0
    %v496 = vmax.f32 %v495, -1.0
    %v497 = vmul.f32 %v454, %v454
    %v498 = vmin.f32 16.0, %v497
    %v499 = vmul.f32 %v498, 2.1237322e-06
    %v500 = vadd.f32 %v499, 0.00028619796
    %v501 = vmul.f32 %v498, %v500
    %v502 = vadd.f32 %v501, 0.0036580483
    %v503 = vmul.f32 %v498, %v502
    %v504 = vadd.f32 %v503, 0.05243302
    %v505 = vmul.f32 %v498, %v504
    %v506 = vadd.f32 %v505, 0.18741608
    %v507 = vmul.f32 %v498, %v506
    %v508 = vadd.f32 %v507, 1.1283791
    %v509 = vmul.f32 %v454, %v508
    %v510 = vmul.f32 %v498, 3.8918573e-05
    %v511 = vadd.f32 %v510, 0.001143296
    %v512 = vmul.f32 %v498, %v511
    %v513 = vadd.f32 %v512, 0.014752088
    %v514 = vmul.f32 %v498, %v513
    %v515 = vadd.f32 %v514, 0.112945676
    %v516 = vmul.f32 %v498, %v515
    %v517 = vadd.f32 %v516, 0.4994258
    %v518 = vmul.f32 %v498, %v517
    %v519 = vadd.f32 %v518, 1.0
    %v520 = vrcp.pop %v519
    %v521 = vmul.f32 %v519, %v520
    %v522 = vsub.f32 1.0, %v521
    %v523 = vmul.f32 %v520, %v522
    %v524 = vadd.f32 %v520, %v523
    %vm525 = vweird.f32 %v519
    %vm526 = vweird.f32 %v520
    %vm527 = vmor %vm525, %vm526
    %v528 = vsel %vm527, %v520, %v524
    %v529 = vand.u32 2147483647, %v519
    %vm530 = vcmp.eq.f32.partialorder %v529, 8.507059e+37
    %v531 = vand.u32 %v519, 2147483648
    %v532 = vor.u32 1.1754944e-38, %v531
    %v533 = vsel %vm530, %v532, %v528
    %v534 = vmul.f32 %v509, %v533
    %v535 = vmin.f32 %v534, 1.0
    %v536 = vmax.f32 %v535, -1.0
    %v537 = vmul.f32 %v455, %v455
    %v538 = vmin.f32 16.0, %v537
    %v539 = vmul.f32 %v538, 2.1237322e-06
    %v540 = vadd.f32 %v539, 0.00028619796
    %v541 = vmul.f32 %v538, %v540
    %v542 = vadd.f32 %v541, 0.0036580483
    %v543 = vmul.f32 %v538, %v542
    %v544 = vadd.f32 %v543, 0.05243302
    %v545 = vmul.f32 %v538, %v544
    %v546 = vadd.f32 %v545, 0.18741608
    %v547 = vmul.f32 %v538, %v546
    %v548 = vadd.f32 %v547, 1.1283791
    %v549 = vmul.f32 %v455, %v548
    %v550 = vmul.f32 %v538, 3.8918573e-05
    %v551 = vadd.f32 %v550, 0.001143296
    %v552 = vmul.f32 %v538, %v551
    %v553 = vadd.f32 %v552, 0.014752088
    %v554 = vmul.f32 %v538, %v553
    %v555 = vadd.f32 %v554, 0.112945676
    %v556 = vmul.f32 %v538, %v555
    %v557 = vadd.f32 %v556, 0.4994258
    %v558 = vmul.f32 %v538, %v557
    %v559 = vadd.f32 %v558, 1.0
    %v560 = vrcp.pop %v559
    %v561 = vmul.f32 %v559, %v560
    %v562 = vsub.f32 1.0, %v561
    %v563 = vmul.f32 %v560, %v562
    %v564 = vadd.f32 %v560, %v563
    %vm565 = vweird.f32 %v559
    %vm566 = vweird.f32 %v560
    %vm567 = vmor %vm565, %vm566
    %v568 = vsel %vm567, %v560, %v564
    %v569 = vand.u32 2147483647, %v559
    %vm570 = vcmp.eq.f32.partialorder %v569, 8.507059e+37
    %v571 = vand.u32 %v559, 2147483648
    %v572 = vor.u32 1.1754944e-38, %v571
    %v573 = vsel %vm570, %v572, %v568
    %v574 = vmul.f32 %v549, %v573
    %v575 = vmin.f32 %v574, 1.0
    %v576 = vmax.f32 %v575, -1.0
    %v577 = vmul.f32 %v456, %v456
    %v578 = vmin.f32 16.0, %v577
    %v579 = vmul.f32 %v578, 2.1237322e-06
    %v580 = vadd.f32 %v579, 0.00028619796
    %v581 = vmul.f32 %v578, %v580
    %v582 = vadd.f32 %v581, 0.0036580483
    %v583 = vmul.f32 %v578, %v582
    %v584 = vadd.f32 %v583, 0.05243302
    %v585 = vmul.f32 %v578, %v584
    %v586 = vadd.f32 %v585, 0.18741608
    %v587 = vmul.f32 %v578, %v586
    %v588 = vadd.f32 %v587, 1.1283791
    %v589 = vmul.f32 %v456, %v588
    %v590 = vmul.f32 %v578, 3.8918573e-05
    %v591 = vadd.f32 %v590, 0.001143296
    %v592 = vmul.f32 %v578, %v591
    %v593 = vadd.f32 %v592, 0.014752088
    %v594 = vmul.f32 %v578, %v593
    %v595 = vadd.f32 %v594, 0.112945676
    %v596 = vmul.f32 %v578, %v595
    %v597 = vadd.f32 %v596, 0.4994258
    %v598 = vmul.f32 %v578, %v597
    %v599 = vadd.f32 %v598, 1.0
    %v600 = vrcp.pop %v599
    %v601 = vmul.f32 %v599, %v600
    %v602 = vsub.f32 1.0, %v601
    %v603 = vmul.f32 %v600, %v602
    %v604 = vadd.f32 %v600, %v603
    %vm605 = vweird.f32 %v599
    %vm606 = vweird.f32 %v600
    %vm607 = vmor %vm605, %vm606
    %v608 = vsel %vm607, %v600, %v604
    %v609 = vand.u32 2147483647, %v599
    %vm610 = vcmp.eq.f32.partialorder %v609, 8.507059e+37
    %v611 = vand.u32 %v599, 2147483648
    %v612 = vor.u32 1.1754944e-38, %v611
    %v613 = vsel %vm610, %v612, %v608
    %v614 = vmul.f32 %v589, %v613
    %v615 = vmin.f32 %v614, 1.0
    %v616 = vmax.f32 %v615, -1.0
    %v617 = vadd.f32 %v496, 1.0
    %v618 = vadd.f32 %v536, 1.0
    %v619 = vadd.f32 %v576, 1.0
    %v620 = vadd.f32 %v616, 1.0
    %v621 = vmul.f32 %v449, %v617
    %v622 = vmul.f32 %v450, %v618
    %v623 = vmul.f32 %v451, %v619
    %v624 = vmul.f32 %v452, %v620
    %v629 = vrot.slane %v621, 7
    %v630 = vrot.slane %v622, 7
    %v631 = vsel %vm135, %v629, %v630
    %v632 = vrot.slane %v623, 7
    %v633 = vsel %vm135, %v630, %v632
    %v634 = vrot.slane %v624, 7
    %v635 = vsel %vm135, %v632, %v634
    %v640 = vsel %vm135, 0.0, %v629
    %v641 = vsel %vm156, %v640, 0.0
    %v642 = vsel %vm157, %v631, 0.0
    %v643 = vsel %vm158, %v633, 0.0
    %v644 = vsel %vm159, %v635, 0.0
    %v645 = vrot.slane %v621, 1
    %v646 = vrot.slane %v622, 1
    %v647 = vsel %vm164, %v645, %v646
    %v648 = vrot.slane %v623, 1
    %v649 = vsel %vm164, %v646, %v648
    %v650 = vrot.slane %v624, 1
    %v651 = vsel %vm164, %v648, %v650
    %v656 = vsel %vm164, %v650, 0.0
    %v657 = vsel %vm185, %v647, 0.0
    %v658 = vsel %vm186, %v649, 0.0
    %v659 = vsel %vm187, %v651, 0.0
    %v660 = vsel %vm188, %v656, 0.0
    %v661 = vld [vmem:[#allocation7] sm:$0xff]
    %v662 = vld [vmem:[#allocation7 + $0x8] sm:$0xff]
    %v663 = vld [vmem:[#allocation7 + $0x10] sm:$0xff]
    %v664 = vld [vmem:[#allocation7 + $0x18] sm:$0xff]
    %v665 = vld [vmem:[#allocation7 + $0x20] sm:$0xff]
    %v666 = vld [vmem:[#allocation7 + $0x28] sm:$0xff]
    %v667 = vld [vmem:[#allocation7 + $0x30] sm:$0xff]
    %v668 = vld [vmem:[#allocation7 + $0x38] sm:$0xff]
    %v669 = vld [vmem:[#allocation7 + $0x40] sm:$0xff]
    %v670 = vld [vmem:[#allocation7 + $0x48] sm:$0xff]
    %v671 = vld [vmem:[#allocation7 + $0x50] sm:$0xff]
    %v672 = vld [vmem:[#allocation7 + $0x58] sm:$0xff]
    %v673 = vld [vmem:[#allocation7 + $0x60] sm:$0xff]
    %v674 = vld [vmem:[#allocation7 + $0x68] sm:$0xff]
    %v675 = vld [vmem:[#allocation7 + $0x70] sm:$0xff]
    %v676 = vld [vmem:[#allocation7 + $0x78] sm:$0xff]
    %s677 = scalar_lea.vmem [#allocation7], 128
    %v678 = vld [vmem:[%s677] sm:$0xff]
    %v679 = vld [vmem:[%s677 + $0x8] sm:$0xff]
    %v680 = vld [vmem:[%s677 + $0x10] sm:$0xff]
    %v681 = vld [vmem:[%s677 + $0x18] sm:$0xff]
    %v682 = vld [vmem:[%s677 + $0x20] sm:$0xff]
    %v683 = vld [vmem:[%s677 + $0x28] sm:$0xff]
    %v684 = vld [vmem:[%s677 + $0x30] sm:$0xff]
    %v685 = vld [vmem:[%s677 + $0x38] sm:$0xff]
    %v686 = vld [vmem:[%s677 + $0x40] sm:$0xff]
    %v687 = vld [vmem:[%s677 + $0x48] sm:$0xff]
    %v688 = vld [vmem:[%s677 + $0x50] sm:$0xff]
    %v689 = vld [vmem:[%s677 + $0x58] sm:$0xff]
    %v690 = vld [vmem:[%s677 + $0x60] sm:$0xff]
    %v691 = vld [vmem:[%s677 + $0x68] sm:$0xff]
    %v692 = vld [vmem:[%s677 + $0x70] sm:$0xff]
    %v693 = vld [vmem:[%s677 + $0x78] sm:$0xff]
    %694 = vmatpush.msra.mxu0 %v693
    %695 = vmatpush.msra.mxu0 %v692
    %696 = vmatpush.msra.mxu0 %v691
    %697 = vmatpush.msra.mxu0 %v690
    %698 = vmatpush.msra.mxu0 %v689
    %699 = vmatpush.msra.mxu0 %v688
    %700 = vmatpush.msra.mxu0 %v687
    %701 = vmatpush.msra.mxu0 %v686
    %702 = vmatpush.msra.mxu0 %v685
    %703 = vmatpush.msra.mxu0 %v684
    %704 = vmatpush.msra.mxu0 %v683
    %705 = vmatpush.msra.mxu0 %v682
    %706 = vmatpush.msra.mxu0 %v681
    %707 = vmatpush.msra.mxu0 %v680
    %708 = vmatpush.msra.mxu0 %v679
    %709 = vmatpush.msra.mxu0 %v678
    %710 = vmatmul.f32.gmra.mxu0 %v621
    %v711 = vpop.f32.mrf.mxu0
    %v712 = vadd.f32 0.0, %v711
    %713 = vmatmul.f32.gmra.mxu0 %v622
    %v714 = vpop.f32.mrf.mxu0
    %v715 = vadd.f32 0.0, %v714
    %716 = vmatmul.f32.gmra.mxu0 %v623
    %v717 = vpop.f32.mrf.mxu0
    %v718 = vadd.f32 0.0, %v717
    %719 = vmatmul.f32.gmra.mxu0 %v624
    %v720 = vpop.f32.mrf.mxu0
    %v721 = vadd.f32 0.0, %v720
    %722 = vdwg.mxu0
    %723 = vmatpush.msra.mxu0 %v676
    %724 = vmatpush.msra.mxu0 %v675
    %725 = vmatpush.msra.mxu0 %v674
    %726 = vmatpush.msra.mxu0 %v673
    %727 = vmatpush.msra.mxu0 %v672
    %728 = vmatpush.msra.mxu0 %v671
    %729 = vmatpush.msra.mxu0 %v670
    %730 = vmatpush.msra.mxu0 %v669
    %731 = vmatpush.msra.mxu0 %v668
    %732 = vmatpush.msra.mxu0 %v667
    %733 = vmatpush.msra.mxu0 %v666
    %734 = vmatpush.msra.mxu0 %v665
    %735 = vmatpush.msra.mxu0 %v664
    %736 = vmatpush.msra.mxu0 %v663
    %737 = vmatpush.msra.mxu0 %v662
    %738 = vmatpush.msra.mxu0 %v661
    %739 = vmatmul.f32.gmra.mxu0 %v641
    %v740 = vpop.f32.mrf.mxu0
    %v741 = vadd.f32 %v712, %v740
    %742 = vmatmul.f32.gmra.mxu0 %v642
    %v743 = vpop.f32.mrf.mxu0
    %v744 = vadd.f32 %v715, %v743
    %745 = vmatmul.f32.gmra.mxu0 %v643
    %v746 = vpop.f32.mrf.mxu0
    %v747 = vadd.f32 %v718, %v746
    %748 = vmatmul.f32.gmra.mxu0 %v644
    %v749 = vpop.f32.mrf.mxu0
    %v750 = vadd.f32 %v721, %v749
    %751 = vdwg.mxu0
    %s752 = scalar_lea.vmem [#allocation7], 256
    %v753 = vld [vmem:[%s752] sm:$0xff]
    %v754 = vld [vmem:[%s752 + $0x8] sm:$0xff]
    %v755 = vld [vmem:[%s752 + $0x10] sm:$0xff]
    %v756 = vld [vmem:[%s752 + $0x18] sm:$0xff]
    %v757 = vld [vmem:[%s752 + $0x20] sm:$0xff]
    %v758 = vld [vmem:[%s752 + $0x28] sm:$0xff]
    %v759 = vld [vmem:[%s752 + $0x30] sm:$0xff]
    %v760 = vld [vmem:[%s752 + $0x38] sm:$0xff]
    %v761 = vld [vmem:[%s752 + $0x40] sm:$0xff]
    %v762 = vld [vmem:[%s752 + $0x48] sm:$0xff]
    %v763 = vld [vmem:[%s752 + $0x50] sm:$0xff]
    %v764 = vld [vmem:[%s752 + $0x58] sm:$0xff]
    %v765 = vld [vmem:[%s752 + $0x60] sm:$0xff]
    %v766 = vld [vmem:[%s752 + $0x68] sm:$0xff]
    %v767 = vld [vmem:[%s752 + $0x70] sm:$0xff]
    %v768 = vld [vmem:[%s752 + $0x78] sm:$0xff]
    %769 = vmatpush.msra.mxu0 %v768
    %770 = vmatpush.msra.mxu0 %v767
    %771 = vmatpush.msra.mxu0 %v766
    %772 = vmatpush.msra.mxu0 %v765
    %773 = vmatpush.msra.mxu0 %v764
    %774 = vmatpush.msra.mxu0 %v763
    %775 = vmatpush.msra.mxu0 %v762
    %776 = vmatpush.msra.mxu0 %v761
    %777 = vmatpush.msra.mxu0 %v760
    %778 = vmatpush.msra.mxu0 %v759
    %779 = vmatpush.msra.mxu0 %v758
    %780 = vmatpush.msra.mxu0 %v757
    %781 = vmatpush.msra.mxu0 %v756
    %782 = vmatpush.msra.mxu0 %v755
    %783 = vmatpush.msra.mxu0 %v754
    %784 = vmatpush.msra.mxu0 %v753
    %785 = vmatmul.f32.gmra.mxu0 %v657
    %v786 = vpop.f32.mrf.mxu0
    %v787 = vadd.f32 0.0, %v786
    %788 = vmatmul.f32.gmra.mxu0 %v658
    %v789 = vpop.f32.mrf.mxu0
    %v790 = vadd.f32 0.0, %v789
    %791 = vmatmul.f32.gmra.mxu0 %v659
    %v792 = vpop.f32.mrf.mxu0
    %v793 = vadd.f32 0.0, %v792
    %794 = vmatmul.f32.gmra.mxu0 %v660
    %v795 = vpop.f32.mrf.mxu0
    %v796 = vadd.f32 0.0, %v795
    %797 = vdwg.mxu0
    %v798 = vadd.f32 %v741, %v787
    %v799 = vadd.f32 %v744, %v790
    %v800 = vadd.f32 %v747, %v793
    %v801 = vadd.f32 %v750, %v796
    %802 = vadd.xlane.f32.xlu0 %v798
    %v803 = vpop.xlane.xlu0 %802
    %804 = vadd.xlane.f32.xlu0 %v799
    %v805 = vpop.xlane.xlu0 %804
    %806 = vadd.xlane.f32.xlu0 %v800
    %v807 = vpop.xlane.xlu0 %806
    %808 = vadd.xlane.f32.xlu0 %v801
    %v809 = vpop.xlane.xlu0 %808
    %v810 = vadd.f32 %v803, %v805
    %v811 = vrot.slane %v810, 4
    %v812 = vadd.f32 %v810, %v811
    %v813 = vrot.slane %v812, 2
    %v814 = vadd.f32 %v812, %v813
    %v815 = vrot.slane %v814, 1
    %v816 = vadd.f32 %v814, %v815
    %v817 = vadd.f32 %v807, %v809
    %v818 = vrot.slane %v817, 4
    %v819 = vadd.f32 %v817, %v818
    %v820 = vrot.slane %v819, 2
    %v821 = vadd.f32 %v819, %v820
    %v822 = vrot.slane %v821, 1
    %v823 = vadd.f32 %v821, %v822
    %v824 = vmul.f32 %v816, 0.00048828125
    %v825 = vmul.f32 %v823, 0.00048828125
    %v826 = vsub.f32 %v798, %v824
    %v827 = vsub.f32 %v799, %v824
    %v828 = vsub.f32 %v800, %v825
    %v829 = vsub.f32 %v801, %v825
    %v830 = vmul.f32 %v826, %v826
    %v831 = vmul.f32 %v827, %v827
    %v832 = vmul.f32 %v828, %v828
    %v833 = vmul.f32 %v829, %v829
    %834 = vadd.xlane.f32.xlu0 %v830
    %v835 = vpop.xlane.xlu0 %834
    %836 = vadd.xlane.f32.xlu0 %v831
    %v837 = vpop.xlane.xlu0 %836
    %838 = vadd.xlane.f32.xlu0 %v832
    %v839 = vpop.xlane.xlu0 %838
    %840 = vadd.xlane.f32.xlu0 %v833
    %v841 = vpop.xlane.xlu0 %840
    %v842 = vadd.f32 %v835, %v837
    %v843 = vrot.slane %v842, 4
    %v844 = vadd.f32 %v842, %v843
    %v845 = vrot.slane %v844, 2
    %v846 = vadd.f32 %v844, %v845
    %v847 = vrot.slane %v846, 1
    %v848 = vadd.f32 %v846, %v847
    %v849 = vadd.f32 %v839, %v841
    %v850 = vrot.slane %v849, 4
    %v851 = vadd.f32 %v849, %v850
    %v852 = vrot.slane %v851, 2
    %v853 = vadd.f32 %v851, %v852
    %v854 = vrot.slane %v853, 1
    %v855 = vadd.f32 %v853, %v854
    %v856 = vmul.f32 %v848, 0.00048828125
    %v857 = vmul.f32 %v855, 0.00048828125
    %v858 = vadd.f32 %v856, 1e-05
    %v859 = vadd.f32 %v857, 1e-05
    %v860 = vrsqrt.pop %v858
    %v861 = vmul.f32 %v860, %v858
    %v862 = vmul.f32 %v861, %v860
    %v863 = vmul.f32 0.5, %v862
    %v864 = vsub.f32 1.5, %v863
    %v865 = vmul.f32 %v860, %v864
    %vm866 = vweird.f32 %v858
    %vm867 = vweird.f32 %v860
    %vm868 = vmor %vm866, %vm867
    %v869 = vsel %vm868, %v860, %v865
    %v870 = vrsqrt.pop %v859
    %v871 = vmul.f32 %v870, %v859
    %v872 = vmul.f32 %v871, %v870
    %v873 = vmul.f32 0.5, %v872
    %v874 = vsub.f32 1.5, %v873
    %v875 = vmul.f32 %v870, %v874
    %vm876 = vweird.f32 %v859
    %vm877 = vweird.f32 %v870
    %vm878 = vmor %vm876, %vm877
    %v879 = vsel %vm878, %v870, %v875
    %v880 = vld [vmem:[%s5] sm:$0x1]
    %v881 = vmul.f32 %v880, %v869
    %v882 = vmul.f32 %v880, %v879
    %v883 = vld [vmem:[%s6] sm:$0x1]
    %v884 = vmul.f32 %v824, %v881
    %v885 = vmul.f32 %v825, %v882
    %v886 = vsub.f32 %v883, %v884
    %v887 = vsub.f32 %v883, %v885
    %v890 = vperm.slane %v881, 0
    %v891 = vperm.slane %v882, 0
    %v894 = vmul.f32 %v798, %v890
    %v895 = vmul.f32 %v799, %v890
    %v896 = vmul.f32 %v800, %v891
    %v897 = vmul.f32 %v801, %v891
    %v900 = vperm.slane %v886, 0
    %v901 = vperm.slane %v887, 0
    %v904 = vadd.f32 %v894, %v900
    %v905 = vadd.f32 %v895, %v900
    %v906 = vadd.f32 %v896, %v901
    %v907 = vadd.f32 %v897, %v901
    %908 = vst [vmem:[#allocation8] sm:$0xff] %v904
    %909 = vst [vmem:[#allocation8 + $0x8] sm:$0xff] %v905
    %910 = vst [vmem:[#allocation8 + $0x10] sm:$0xff] %v906
    %911 = vst [vmem:[#allocation8 + $0x18] sm:$0xff] %v907
    // Predicated region
    $region42: #{tpu_custom_call.1} parent=1 // pred_check
      _
    $region43: #{tpu_custom_call.1} parent=1 // pred_check_branch
      %913 = sbr.rel (0) target = $region45
    $region44: #{tpu_custom_call.1} parent=1 // pred_region
      %915 = vsyncadd [#allocation4], 0
      %s916 = sshll.u32 [#allocation8], 4
      %s917 = int_to_ptr.vmem [resolvable:$true] %s916
      %s918 = sshll.u32 %s7, 4
      %s919 = int_to_ptr.hbm [resolvable:$true] %s918
      %924 = dma.vmem_to_hbm [thread:$0]  %s917, 512, %s919, [#allocation4], 128, 128, 8
    $region45: #{tpu_custom_call.1} parent=1 // pred_fallthru
      _
    // Predicated region
    $region46: #{tpu_custom_call.1} parent=1 // pred_check
      _
    $region47: #{tpu_custom_call.1} parent=1 // pred_check_branch
      %926 = sbr.rel (0) target = $region49
    $region48: #{tpu_custom_call.1} parent=1 // pred_region
      %928 = dma.done [#allocation4], 512
    $region49: #{tpu_custom_call.1} parent=1 // pred_fallthru
      _
    %929 = vsyncpa [#allocation3], 1
    %930 = vsyncpa [#allocation6], 1
    %931 = vsyncpa [#allocation4], 1

</llo_original>
